<compile_context>
chip_gen: v5e
topology: v5e:2x2
jax: 0.10.0
libtpu: 0.0.40
codegen_flags: <defaults>
</compile_context>

<pallas_src>
import jax
import jax.numpy as jnp
from jax.experimental import pallas as pl
from jax.experimental.pallas import tpu as pltpu


# ----------------------------- Kernel 1: tiled linear projection -----------------------------
def _linear_kernel(x_ref, w_ref, b_ref, o_ref):
    # x: (TM, d_in) f32, w: (d_in, d_out) f32, b: (1, d_out) f32 -> o: (TM, d_out) f32
    # bf16 MXU inputs, f32 accumulation, f32 bias add.
    x = x_ref[...].astype(jnp.bfloat16)
    w = w_ref[...].astype(jnp.bfloat16)
    o_ref[...] = jnp.dot(x, w, preferred_element_type=jnp.float32) + b_ref[...]


def pallas_linear(x2d, w, b, *, tm=256):
    """x2d: (N, d_in), w: (d_in, d_out), b: (d_out,) -> (N, d_out), row-tiled."""
    n, d_in = x2d.shape
    d_out = w.shape[1]
    if n <= tm or n % 8 != 0:
        # Single full-array block (block dims == full dims is always a legal BlockSpec).
        tm = n
    grid = (pl.cdiv(n, tm),)
    return pl.pallas_call(
        _linear_kernel,
        out_shape=jax.ShapeDtypeStruct((n, d_out), jnp.float32),
        grid=grid,
        in_specs=[
            pl.BlockSpec((tm, d_in), lambda i: (i, 0)),
            pl.BlockSpec((d_in, d_out), lambda i: (0, 0)),
            pl.BlockSpec((1, d_out), lambda i: (0, 0)),
        ],
        out_specs=pl.BlockSpec((tm, d_out), lambda i: (i, 0)),
        compiler_params=pltpu.CompilerParams(dimension_semantics=("parallel",)),
    )(x2d, w, b.reshape(1, d_out))


# ----------------------------- Kernel 2: scaled dot-product attention -----------------------------
def _make_attn_kernel(with_attention):
    def _attn_kernel(q_ref, k_ref, v_ref, o_ref, *rest):
        # q/k/v refs: (1, hg, S, D) bf16; q is pre-scaled by 1/sqrt(D) (folded into Wq).
        q = q_ref[0]
        k = k_ref[0]
        v = v_ref[0]
        # scores: (hg, Sq, Sk), f32 accumulation on the MXU; contraction over D with the
        # transposed operand consumed directly (no explicit k.T / XLU transpose).
        scores = jnp.einsum("hqd,hkd->hqk", q, k, preferred_element_type=jnp.float32)
        scores = scores - jnp.max(scores, axis=-1, keepdims=True)
        p = jnp.exp(scores)  # f32 softmax math
        attn = p * pl.reciprocal(jnp.sum(p, axis=-1, keepdims=True), approx=True)
        out = jnp.einsum("hqk,hkd->hqd", attn.astype(v.dtype), v,
                         preferred_element_type=jnp.float32)
        o_ref[0] = out.astype(o_ref.dtype)
        if with_attention:
            a_ref = rest[0]
            a_ref[0] = attn.astype(a_ref.dtype)

    return _attn_kernel


def pallas_attention(q, k, v, *, heads_per_block=None, return_attention=True):
    """q,k,v: (B, H, S, D) f32 (q pre-scaled) -> (out (B,H,Sq,D), attn (B,H,Sq,Sk) or None)."""
    B, H, Sq, D = q.shape
    Sk = k.shape[2]
    hg = H if heads_per_block is None else heads_per_block
    assert H % hg == 0
    grid = (B, H // hg)

    q_spec = pl.BlockSpec((1, hg, Sq, D), lambda b, g: (b, g, 0, 0))
    kv_spec = pl.BlockSpec((1, hg, Sk, D), lambda b, g: (b, g, 0, 0))
    out_shapes = [jax.ShapeDtypeStruct((B, H, Sq, D), jnp.float32)]
    out_specs = [pl.BlockSpec((1, hg, Sq, D), lambda b, g: (b, g, 0, 0))]
    if return_attention:
        out_shapes.append(jax.ShapeDtypeStruct((B, H, Sq, Sk), jnp.float32))
        out_specs.append(pl.BlockSpec((1, hg, Sq, Sk), lambda b, g: (b, g, 0, 0)))

    outs = pl.pallas_call(
        _make_attn_kernel(return_attention),
        out_shape=tuple(out_shapes),
        grid=grid,
        in_specs=[q_spec, kv_spec, kv_spec],
        out_specs=tuple(out_specs),
        compiler_params=pltpu.CompilerParams(
            dimension_semantics=("parallel", "parallel")),
    )(q.astype(jnp.bfloat16), k.astype(jnp.bfloat16), v.astype(jnp.bfloat16))
    if return_attention:
        return outs[0], outs[1]
    return outs[0], None


# ----------------------------- Module wrapper -----------------------------
class ScaleDotProductAttentionPallas:
    def __init__(self, n_dim, n_head, key):
        self.n_dim = n_dim
        self.n_head = n_head
        d_model = n_head * n_dim
        ks = jax.random.split(key, 6)
        bound = 1.0 / float(d_model) ** 0.5  # same init scheme as torch.nn.Linear
        # Stored already transposed: (d_in, d_out)
        self.wq = jax.random.uniform(ks[0], (d_model, d_model), jnp.float32, -bound, bound)
        self.bq = jax.random.uniform(ks[1], (d_model,), jnp.float32, -bound, bound)
        self.wk = jax.random.uniform(ks[2], (d_model, d_model), jnp.float32, -bound, bound)
        self.bk = jax.random.uniform(ks[3], (d_model,), jnp.float32, -bound, bound)
        self.wv = jax.random.uniform(ks[4], (d_model, d_model), jnp.float32, -bound, bound)
        self.bv = jax.random.uniform(ks[5], (d_model,), jnp.float32, -bound, bound)

        # Fold 1/sqrt(n_dim) into the query projection: scores = (x Wq s + bq s) . k
        # is mathematically identical to scaling the scores afterwards.
        scale = 1.0 / float(n_dim) ** 0.5
        self.wq_scaled = self.wq * scale
        self.bq_scaled = self.bq * scale
        # Fused lane-dense (d_model, 3*d_model) projection for the self-attention path.
        self.w_qkv = jnp.concatenate([self.wq_scaled, self.wk, self.wv], axis=1)
        self.b_qkv = jnp.concatenate([self.bq_scaled, self.bk, self.bv], axis=0)

    def __call__(self, query, key, value, masking=False):
        if masking:
            # TODO(synk): subsequent-mask (causal) fill is not implemented.
            raise NotImplementedError("masking=True branch is not implemented")
        B, Sq, d_model = query.shape
        Sk = key.shape[1]
        H, D = self.n_head, self.n_dim

        if (query is key) and (key is value):
            # Self-attention fast path: one fused QKV projection (x read once, 3x lane width).
            qkv = pallas_linear(query.reshape(B * Sq, d_model), self.w_qkv, self.b_qkv)
            q2d = qkv[:, :d_model]
            k2d = qkv[:, d_model:2 * d_model]
            v2d = qkv[:, 2 * d_model:]
        else:
            # General (cross-attention) path: three row-tiled projections.
            q2d = pallas_linear(query.reshape(B * Sq, d_model), self.wq_scaled, self.bq_scaled)
            k2d = pallas_linear(key.reshape(B * Sk, d_model), self.wk, self.bk)
            v2d = pallas_linear(value.reshape(B * Sk, d_model), self.wv, self.bv)

        # (B, S, H, D) -> (B, H, S, D)   (matches .view(...).transpose(1, 2))
        q = q2d.reshape(B, Sq, H, D).transpose(0, 2, 1, 3)
        k = k2d.reshape(B, Sk, H, D).transpose(0, 2, 1, 3)
        v = v2d.reshape(B, Sk, H, D).transpose(0, 2, 1, 3)

        output, attention = pallas_attention(q, k, v, return_attention=True)
        return output, attention


# ----------------------------- Reference (pure JAX, f32) for sanity -----------------------------
def reference(module, query, key, value):
    B, Sq, d_model = query.shape
    Sk = key.shape[1]
    H, D = module.n_head, module.n_dim
    q = (query.reshape(B * Sq, d_model) @ module.wq + module.bq).reshape(B, Sq, H, D).transpose(0, 2, 1, 3)
    k = (key.reshape(B * Sk, d_model) @ module.wk + module.bk).reshape(B, Sk, H, D).transpose(0, 2, 1, 3)
    v = (value.reshape(B * Sk, d_model) @ module.wv + module.bv).reshape(B, Sk, H, D).transpose(0, 2, 1, 3)
    scores = jnp.einsum("bhqd,bhkd->bhqk", q, k) / jnp.sqrt(jnp.float32(D))
    attn = jax.nn.softmax(scores, axis=-1)
    out = jnp.einsum("bhqk,bhkd->bhqd", attn, v)
    return out, attn


if __name__ == "__main__":
    n_dim, n_head = 8, 4          # d_model = 32
    batch, seq = 2, 8
    d_model = n_dim * n_head

    key0 = jax.random.PRNGKey(0)
    kx, kq, kk, kv, kparams = jax.random.split(key0, 5)

    module = ScaleDotProductAttentionPallas(n_dim, n_head, kparams)

    # --- Self-attention path (fused QKV projection) ---
    x = jax.random.normal(kx, (batch, seq, d_model), jnp.float32)
    out, attn = module(x, x, x)
    out = jax.block_until_ready(out)
    attn = jax.block_until_ready(attn)
    assert out.shape == (batch, n_head, seq, n_dim)
    assert attn.shape == (batch, n_head, seq, seq)
    ref_out, ref_attn = reference(module, x, x, x)
    # bf16 MXU inputs + approx reciprocal -> tolerances widened vs. the pure-f32 reference.
    assert jnp.allclose(out, ref_out, atol=1e-1, rtol=1e-1)
    assert jnp.allclose(attn, ref_attn, atol=5e-2, rtol=5e-2)

    # --- Cross-attention path (separate projections) ---
    query = jax.random.normal(kq, (batch, seq, d_model), jnp.float32)
    key_in = jax.random.normal(kk, (batch, seq, d_model), jnp.float32)
    value = jax.random.normal(kv, (batch, seq, d_model), jnp.float32)
    out2, attn2 = module(query, key_in, value)
    out2 = jax.block_until_ready(out2)
    attn2 = jax.block_until_ready(attn2)
    ref_out2, ref_attn2 = reference(module, query, key_in, value)
    assert jnp.allclose(out2, ref_out2, atol=1e-1, rtol=1e-1)
    assert jnp.allclose(attn2, ref_attn2, atol=5e-2, rtol=5e-2)

    print("KERNEL_OK")
</pallas_src>

<mosaic_0001>
module attributes {stable_mosaic.version = 11 : i64} {
  func.func @_linear_kernel(%arg0: i32, %arg1: memref<16x32xf32, #tpu.memory_space<vmem>>, %arg2: memref<32x96xf32, #tpu.memory_space<vmem>>, %arg3: memref<1x96xf32, #tpu.memory_space<vmem>>, %arg4: memref<16x96xf32, #tpu.memory_space<vmem>>) attributes {dimension_semantics = [#tpu.dimension_semantics<parallel>], iteration_bounds = array<i64: 1>, scalar_prefetch = 0 : i64, scratch_operands = 0 : i64, tpu.core_type = #tpu.core_type<tc>, window_params = [{transform_indices = @transform_0, window_bounds = array<i64: 16, 32>}, {pipeline_mode = #tpu.pipeline_mode<synchronous>, transform_indices = @transform_1, window_bounds = array<i64: 32, 96>}, {pipeline_mode = #tpu.pipeline_mode<synchronous>, transform_indices = @transform_2, window_bounds = array<i64: 1, 96>}, {transform_indices = @transform_3, window_bounds = array<i64: 16, 96>}]} {
    %c0 = arith.constant 0 : index
    %c0_0 = arith.constant 0 : index
    %0 = vector.load %arg1[%c0, %c0_0] : memref<16x32xf32, #tpu.memory_space<vmem>>, vector<16x32xf32>
    %1 = arith.truncf %0 : vector<16x32xf32> to vector<16x32xbf16>
    %c0_1 = arith.constant 0 : index
    %c0_2 = arith.constant 0 : index
    %2 = vector.load %arg2[%c0_1, %c0_2] : memref<32x96xf32, #tpu.memory_space<vmem>>, vector<32x96xf32>
    %3 = arith.truncf %2 : vector<32x96xf32> to vector<32x96xbf16>
    %cst = arith.constant dense<0.000000e+00> : vector<16x96xf32>
    %4 = tpu.matmul %1, %3, %cst {dimension_numbers = #tpu.dot_dimension_numbers<[1], [0], [0], [1], [0, 0, 1, 1], [], []>} : vector<16x32xbf16>, vector<32x96xbf16>, vector<16x96xf32> -> vector<16x96xf32>
    %c0_3 = arith.constant 0 : index
    %c0_4 = arith.constant 0 : index
    %5 = vector.load %arg3[%c0_3, %c0_4] : memref<1x96xf32, #tpu.memory_space<vmem>>, vector<1x96xf32>
    %6 = vector.broadcast %5 : vector<1x96xf32> to vector<16x96xf32>
    %7 = arith.addf %4, %6 : vector<16x96xf32>
    %c0_5 = arith.constant 0 : index
    %c0_6 = arith.constant 0 : index
    %8 = vector.load %arg4[%c0_5, %c0_6] : memref<16x96xf32, #tpu.memory_space<vmem>>, vector<16x96xf32>
    tpu.vector_store %arg4[%c0_5, %c0_6], %7 {strides = array<i32>} : memref<16x96xf32, #tpu.memory_space<vmem>>, vector<16x96xf32>,
    return
  }
  func.func @transform_0(%arg0: i32) -> (i32, i32) {
    %c0_i32 = arith.constant 0 : i32
    %c0_i32_0 = arith.constant 0 : i32
    return %arg0, %c0_i32 : i32, i32
  }
  func.func @transform_1(%arg0: i32) -> (i32, i32) {
    %c0_i32 = arith.constant 0 : i32
    %c0_i32_0 = arith.constant 0 : i32
    %c0_i32_1 = arith.constant 0 : i32
    return %c0_i32, %c0_i32_0 : i32, i32
  }
  func.func @transform_2(%arg0: i32) -> (i32, i32) {
    %c0_i32 = arith.constant 0 : i32
    %c0_i32_0 = arith.constant 0 : i32
    %c0_i32_1 = arith.constant 0 : i32
    return %c0_i32, %c0_i32_0 : i32, i32
  }
  func.func @transform_3(%arg0: i32) -> (i32, i32) {
    %c0_i32 = arith.constant 0 : i32
    %c0_i32_0 = arith.constant 0 : i32
    return %arg0, %c0_i32 : i32, i32
  }
}

</mosaic_0001>

<llo_original>
// kernel: tpu_custom_call.1
$region0: #{tpu_custom_call.1}
  #allocation0 [shape = 'u32[]', space=smem, size = 0x4, offset = 0x4, fixed_abs, tag = 'smem constant byte address 0x4 - core index']
  #allocation1 [shape = 'u32[72,128]{1,0:T(1,128)}', space=vmem, size = 0x9000, scoped, tag = 'internal scratch']
  %s0 = inlined_call_operand.hbm [shape: f32[16,32], index: 0, kind: input, shape index: {}]
  %s1 = inlined_call_operand.hbm [shape: f32[32,96], index: 1, kind: input, shape index: {}]
  %s2 = inlined_call_operand.vmem [shape: f32[1,96], index: 2, kind: input, shape index: {}]
  %s3 = inlined_call_operand.hbm [shape: f32[16,96], index: 3, kind: output, shape index: {}]
  %s4 = sld [smem:[#allocation0]]
  $region30: #{tpu_custom_call.1} parent=0
    _
  %s6 = ssub.s32 1, %s4
  %s7 = scalar_select 0, %s6, %s4
  $region1: #{tpu_custom_call.1} parent=0
    #allocation2 [shape = 'u8[8192]{0}', space=vmem, size = 0x2000, scoped, tag = 'input window, operand 0, single buffered']
    #allocation3 [shape = 's32[1]{0}', space=sflag, size = 0x4, scoped, tag = 'scoped memory for tpu_custom_call.1']
    #allocation4 [shape = 's32[1]{0}', space=sflag, size = 0x4, scoped, tag = 'scoped memory for tpu_custom_call.1']
    #allocation5 [shape = 'u8[16384]{0}', space=vmem, size = 0x4000, scoped, tag = 'input window, operand 1, single buffered']
    #allocation6 [shape = 's32[1]{0}', space=sflag, size = 0x4, scoped, tag = 'scoped memory for tpu_custom_call.1']
    #allocation7 [shape = 'u8[8192]{0}', space=vmem, size = 0x2000, scoped, tag = 'output window, operand 0, single buffered']
    %8 = vsyncpa [#allocation3], 0
    %9 = vsyncpa [#allocation6], 0
    %10 = vsyncpa [#allocation4], 0
    // Predicated region
    $region2: #{tpu_custom_call.1} parent=1 // pred_check
      _
    $region3: #{tpu_custom_call.1} parent=1 // pred_check_branch
      %12 = sbr.rel (0) target = $region5
    $region4: #{tpu_custom_call.1} parent=1 // pred_region
      %14 = vsyncadd [#allocation3], 0
      %s15 = sshll.u32 %s0, 4
      %s16 = int_to_ptr.hbm [resolvable:$true] %s15
      %s17 = sshll.u32 [#allocation2], 4
      %s18 = int_to_ptr.vmem [resolvable:$true] %s17
      %23 = dma.hbm_to_vmem [thread:$0]  %s16, 256, %s18, [#allocation3], 128, 128, 8
    $region5: #{tpu_custom_call.1} parent=1 // pred_fallthru
      _
    // Predicated region
    $region6: #{tpu_custom_call.1} parent=1 // pred_check
      _
    $region7: #{tpu_custom_call.1} parent=1 // pred_check_branch
      %25 = sbr.rel (0) target = $region9
    $region8: #{tpu_custom_call.1} parent=1 // pred_region
      %27 = vsyncadd [#allocation6], 0
      %s28 = sshll.u32 %s1, 4
      %s29 = int_to_ptr.hbm [resolvable:$true] %s28
      %s30 = sshll.u32 [#allocation5], 4
      %s31 = int_to_ptr.vmem [resolvable:$true] %s30
      %36 = dma.hbm_to_vmem [thread:$0]  %s29, 512, %s31, [#allocation6], 128, 128, 8
    $region9: #{tpu_custom_call.1} parent=1 // pred_fallthru
      _
    // Predicated region
    $region10: #{tpu_custom_call.1} parent=1 // pred_check
      _
    $region11: #{tpu_custom_call.1} parent=1 // pred_check_branch
      %38 = sbr.rel (0) target = $region13
    $region12: #{tpu_custom_call.1} parent=1 // pred_region
      _
    $region13: #{tpu_custom_call.1} parent=1 // pred_fallthru
      _
    // Predicated region
    $region14: #{tpu_custom_call.1} parent=1 // pred_check
      _
    $region15: #{tpu_custom_call.1} parent=1 // pred_check_branch
      %40 = sbr.rel (0) target = $region17
    $region16: #{tpu_custom_call.1} parent=1 // pred_region
      %42 = dma.done [#allocation3], 256
    $region17: #{tpu_custom_call.1} parent=1 // pred_fallthru
      _
    // Predicated region
    $region18: #{tpu_custom_call.1} parent=1 // pred_check
      _
    $region19: #{tpu_custom_call.1} parent=1 // pred_check_branch
      %44 = sbr.rel (0) target = $region21
    $region20: #{tpu_custom_call.1} parent=1 // pred_region
      %46 = dma.done [#allocation6], 512
    $region21: #{tpu_custom_call.1} parent=1 // pred_fallthru
      _
    %v48 = vld [vmem:[#allocation2] sm:$0xff]
    %v49 = vld [vmem:[#allocation2 + $0x8] sm:$0xff]
    %v50 = vpack.c.bf16 %v49, %v48
    %v51 = vld [vmem:[#allocation5] sm:$0xff]
    %v52 = vld [vmem:[#allocation5 + $0x8] sm:$0xff]
    %v53 = vld [vmem:[#allocation5 + $0x10] sm:$0xff]
    %v54 = vld [vmem:[#allocation5 + $0x18] sm:$0xff]
    %v55 = vpack.c.bf16 %v52, %v51
    %v56 = vpack.c.bf16 %v54, %v53
    %v57 = vld [vmem:[%s2] sm:$0x1]
    %v59 = vperm.slane %v57, 0
    %vm61 = vcmask 261120
    %v63 = vsel %vm61, %v50, 0
    %65 = vmatpush.bf16.msra.mxu0 0
    %66 = vmatpush.bf16.msra.mxu0 0
    %67 = vmatpush.bf16.msra.mxu0 0
    %68 = vmatpush.bf16.msra.mxu0 0
    %69 = vmatpush.bf16.msra.mxu0 0
    %70 = vmatpush.bf16.msra.mxu0 0
    %71 = vmatpush.bf16.msra.mxu0 %v56
    %72 = vmatpush.bf16.msra.mxu0 %v55
    %73 = vmatmul.bf16.gmra.mxu0 %v63
    %v74 = vpop.f32.mrf.mxu0
    %v75 = vadd.f32 %v59, %v74
    %v76 = vpop.f32.mrf.mxu0
    %v77 = vadd.f32 %v59, %v76
    %78 = vdwg.mxu0
    %vm79 = vcmask 785408
    %80 = vst.msk [vmem:[#allocation7] sm:$0xff] %vm79, %v75
    %81 = vst.msk [vmem:[#allocation7 + $0x8] sm:$0xff] %vm79, %v77
    // Predicated region
    $region22: #{tpu_custom_call.1} parent=1 // pred_check
      _
    $region23: #{tpu_custom_call.1} parent=1 // pred_check_branch
      %83 = sbr.rel (0) target = $region25
    $region24: #{tpu_custom_call.1} parent=1 // pred_region
      %85 = vsyncadd [#allocation4], 0
      %s86 = sshll.u32 [#allocation7], 4
      %s87 = int_to_ptr.vmem [resolvable:$true] %s86
      %s88 = sshll.u32 %s3, 4
      %s89 = int_to_ptr.hbm [resolvable:$true] %s88
      %94 = dma.vmem_to_hbm [thread:$0]  %s87, 256, %s89, [#allocation4], 128, 128, 8
    $region25: #{tpu_custom_call.1} parent=1 // pred_fallthru
      _
    // Predicated region
    $region26: #{tpu_custom_call.1} parent=1 // pred_check
      _
    $region27: #{tpu_custom_call.1} parent=1 // pred_check_branch
      %96 = sbr.rel (0) target = $region29
    $region28: #{tpu_custom_call.1} parent=1 // pred_region
      %98 = dma.done [#allocation4], 256
    $region29: #{tpu_custom_call.1} parent=1 // pred_fallthru
      _
    %99 = vsyncpa [#allocation3], 1
    %100 = vsyncpa [#allocation6], 1
    %101 = vsyncpa [#allocation4], 1

</llo_original>
